<compile_context>
chip_gen: v5e
topology: v5e:2x2
jax: 0.10.0
libtpu: 0.0.40
codegen_flags: <defaults>
</compile_context>

<pallas_src>
import functools

import jax
import jax.numpy as jnp
from jax.experimental import pallas as pl
from jax.experimental.pallas import tpu as pltpu

# ---------------- small synthetic HuBERT config ----------------
HIDDEN = 32
NUM_LAYERS = 2                       # transformer layers; hidden_states has NUM_LAYERS + 1 entries
NUM_HEADS = 4
HEAD_DIM = HIDDEN // NUM_HEADS
INTERMEDIATE = 64
CONV_DIM = (32, 32)
CONV_KERNEL = (10, 3)
CONV_STRIDE = (5, 2)
POS_CONV_KERNEL = 4                  # even kernel -> SamePadLayer drops the last frame
POS_CONV_GROUPS = 2
LN_EPS = 1e-5

MXU_DTYPE = jnp.bfloat16             # matmul operand dtype (accumulation stays f32)

_PARALLEL = pltpu.CompilerParams(dimension_semantics=("parallel",))
_ARBITRARY = pltpu.CompilerParams(dimension_semantics=("arbitrary",))


# ======================= in-kernel helpers =======================
def _mxu(a, b):
    """a @ b on the MXU (operands already MXU-ready), f32 accumulation."""
    return jnp.dot(a, b, preferred_element_type=jnp.float32)


def _mxu_nt(a, b):
    """a @ b.T (contract last dims of both) without materializing a transpose."""
    return jax.lax.dot_general(a, b, (((1,), (1,)), ((), ())),
                               preferred_element_type=jnp.float32)


def _gelu(x):
    # TODO(synk): HF HuBERT uses exact erf-GELU; tanh-approx used (erf not guaranteed in Mosaic).
    return jax.nn.gelu(x, approximate=True)


def _ln(x, gamma, beta, eps=LN_EPS):
    mean = jnp.mean(x, axis=-1, keepdims=True)
    var = jnp.mean(jnp.square(x - mean), axis=-1, keepdims=True)
    return (x - mean) * jax.lax.rsqrt(var + eps) * gamma + beta


# ======================= conv feature extractor kernels =======================
def _conv0_gn_gelu_kernel(p_ref, w_ref, g_ref, b_ref, o_ref, *, eps):
    """conv0 (im2col matmul, conv_bias=False) + per-channel GroupNorm over time + GELU."""
    y = _mxu(p_ref[0].astype(MXU_DTYPE), w_ref[...])        # (L0, C0), f32
    mean = jnp.mean(y, axis=0, keepdims=True)                # per-channel stats over time (f32)
    var = jnp.mean(jnp.square(y - mean), axis=0, keepdims=True)
    y = (y - mean) * jax.lax.rsqrt(var + eps) * g_ref[...] + b_ref[...]
    o_ref[0] = _gelu(y)


def conv0_groupnorm_gelu(patches, w, gn_g, gn_b):
    B, L, KC = patches.shape
    C = w.shape[1]
    return pl.pallas_call(
        functools.partial(_conv0_gn_gelu_kernel, eps=LN_EPS),
        grid=(B,),
        out_shape=jax.ShapeDtypeStruct((B, L, C), jnp.float32),
        in_specs=[
            pl.BlockSpec((1, L, KC), lambda b: (b, 0, 0)),
            pl.BlockSpec((KC, C), lambda b: (0, 0)),
            pl.BlockSpec((1, C), lambda b: (0, 0)),
            pl.BlockSpec((1, C), lambda b: (0, 0)),
        ],
        out_specs=pl.BlockSpec((1, L, C), lambda b: (b, 0, 0)),
        compiler_params=_PARALLEL,
    )(patches, w, gn_g, gn_b)


def _conv1_featproj_kernel(p_ref, w_ref, ln_g_ref, ln_b_ref, fp_w_ref, fp_b_ref, o_ref, *, eps):
    """conv1 (im2col matmul) + GELU + feature-projection LayerNorm + Linear on B*S flattened rows."""
    y = _gelu(_mxu(p_ref[...].astype(MXU_DTYPE), w_ref[...]))      # (B*S, C1)
    y = _ln(y, ln_g_ref[...], ln_b_ref[...], eps)
    o_ref[...] = _mxu(y.astype(MXU_DTYPE), fp_w_ref[...]) + fp_b_ref[...]


def conv1_featproj(patches_flat, w, ln_g, ln_b, fp_w, fp_b):
    N, KC = patches_flat.shape
    C = w.shape[1]
    H = fp_w.shape[1]
    return pl.pallas_call(
        functools.partial(_conv1_featproj_kernel, eps=LN_EPS),
        grid=(1,),
        out_shape=jax.ShapeDtypeStruct((N, H), jnp.float32),
        in_specs=[
            pl.BlockSpec((N, KC), lambda i: (0, 0)),
            pl.BlockSpec((KC, C), lambda i: (0, 0)),
            pl.BlockSpec((1, C), lambda i: (0, 0)),
            pl.BlockSpec((1, C), lambda i: (0, 0)),
            pl.BlockSpec((C, H), lambda i: (0, 0)),
            pl.BlockSpec((1, H), lambda i: (0, 0)),
        ],
        out_specs=pl.BlockSpec((N, H), lambda i: (0, 0)),
        compiler_params=_ARBITRARY,
    )(patches_flat, w, ln_g, ln_b, fp_w, fp_b)


# ======================= fused encoder stack (pos-conv + all layers, ONE call) =======================
def _encoder_kernel(h0_ref, hp_ref, pw_ref, pb_ref, elng_ref, elnb_ref,
                    qw_ref, qb_ref, kw_ref, kb_ref, vw_ref, vb_ref,
                    ow_ref, ob_ref, ln1g_ref, ln1b_ref,
                    f1w_ref, f1b_ref, f2w_ref, f2b_ref, ln2g_ref, ln2b_ref,
                    hs_ref, last_ref, x_sc, *, B, S, num_heads, pos_k, eps):
    """Grid axis = transformer layer ('arbitrary').  x_sc carries the (B*S, H) hidden state."""
    lyr = pl.program_id(0)

    # ---- step 0: grouped positional conv (block-diag weight) + SamePad + GELU + residual + LN ----
    @pl.when(lyr == 0)
    def _():
        rows = []
        for b in range(B):
            hpb = hp_ref[b]                                           # (S + pos_k, H) zero-padded
            pos = _mxu(hpb[0:S].astype(MXU_DTYPE), pw_ref[0])
            for k in range(1, pos_k):
                pos = pos + _mxu(hpb[k:k + S].astype(MXU_DTYPE), pw_ref[k])
            rows.append(pos)
        pos_all = jnp.concatenate(rows, axis=0) + pb_ref[...]         # (B*S, H)
        y = h0_ref[...] + _gelu(pos_all)
        x_sc[...] = _ln(y, elng_ref[...], elnb_ref[...], eps)

    x = x_sc[...]                                                     # (B*S, H), f32 carry
    hs_ref[0] = x                                                     # hidden_states[layer] = input of layer
    xb = x.astype(MXU_DTYPE)

    # ---- multi-head self-attention (per-head weights: no lane slicing / lane concat) ----
    q_h, k_h, v_h = [], [], []
    for h in range(num_heads):                                        # dense projections on B*S rows
        q_h.append((_mxu(xb, qw_ref[0, h]) + qb_ref[0, h]).astype(MXU_DTYPE))   # scale folded in weights
        k_h.append((_mxu(xb, kw_ref[0, h]) + kb_ref[0, h]).astype(MXU_DTYPE))
        v_h.append((_mxu(xb, vw_ref[0, h]) + vb_ref[0, h]).astype(MXU_DTYPE))

    attn_rows = []
    for b in range(B):
        r0, r1 = b * S, (b + 1) * S
        # all heads stacked along sublanes -> one batched softmax (single max/exp/sum/recip)
        s_all = jnp.concatenate(
            [_mxu_nt(q_h[h][r0:r1], k_h[h][r0:r1]) for h in range(num_heads)], axis=0)  # (nh*S, S)
        m = jnp.max(s_all, axis=-1, keepdims=True)
        p = jnp.exp(s_all - m)
        p = p * pl.reciprocal(jnp.sum(p, axis=-1, keepdims=True), approx=True)
        p = p.astype(MXU_DTYPE)
        acc = None
        for h in range(num_heads):
            ctx = _mxu(p[h * S:(h + 1) * S], v_h[h][r0:r1])           # (S, head_dim), f32
            contrib = _mxu(ctx.astype(MXU_DTYPE), ow_ref[0, h])       # (S, H): out-proj summed over heads
            acc = contrib if acc is None else acc + contrib
        attn_rows.append(acc)
    attn = jnp.concatenate(attn_rows, axis=0) + ob_ref[0]             # (B*S, H)

    # ---- residual + LN, FFN + residual + LN (post-norm) ----
    h1 = _ln(x + attn, ln1g_ref[0], ln1b_ref[0], eps)
    ff = _gelu(_mxu(h1.astype(MXU_DTYPE), f1w_ref[0]) + f1b_ref[0])
    ff = _mxu(ff.astype(MXU_DTYPE), f2w_ref[0]) + f2b_ref[0]
    x_new = _ln(h1 + ff, ln2g_ref[0], ln2b_ref[0], eps)

    x_sc[...] = x_new
    last_ref[...] = x_new                                             # VMEM-resident; final value persists


def encoder_stack(h_flat, hp, kp, *, B, S):
    BS, H = h_flat.shape
    L, nh, hd, I = NUM_LAYERS, NUM_HEADS, HEAD_DIM, INTERMEDIATE
    padded = hp.shape[1]

    _c2 = lambda l: (0, 0)
    _c3 = lambda l: (0, 0, 0)
    _l3 = lambda l: (l, 0, 0)
    _l4 = lambda l: (l, 0, 0, 0)

    in_specs = [
        pl.BlockSpec((BS, H), _c2),                         # h0 (residual / layer-0 input)
        pl.BlockSpec((B, padded, H), _c3),                  # time-padded h for pos-conv
        pl.BlockSpec((POS_CONV_KERNEL, H, H), _c3),         # block-diagonal pos-conv weight
        pl.BlockSpec((1, H), _c2),                          # pos-conv bias
        pl.BlockSpec((1, H), _c2),                          # encoder LN gamma
        pl.BlockSpec((1, H), _c2),                          # encoder LN beta
        pl.BlockSpec((1, nh, H, hd), _l4),                  # qw (scaled)
        pl.BlockSpec((1, nh, 1, hd), _l4),                  # qb (scaled)
        pl.BlockSpec((1, nh, H, hd), _l4),                  # kw
        pl.BlockSpec((1, nh, 1, hd), _l4),                  # kb
        pl.BlockSpec((1, nh, H, hd), _l4),                  # vw
        pl.BlockSpec((1, nh, 1, hd), _l4),                  # vb
        pl.BlockSpec((1, nh, hd, H), _l4),                  # ow
        pl.BlockSpec((1, 1, H), _l3),                       # ob
        pl.BlockSpec((1, 1, H), _l3),                       # ln1 gamma
        pl.BlockSpec((1, 1, H), _l3),                       # ln1 beta
        pl.BlockSpec((1, H, I), _l3),                       # ff1 w
        pl.BlockSpec((1, 1, I), _l3),                       # ff1 b
        pl.BlockSpec((1, I, H), _l3),                       # ff2 w
        pl.BlockSpec((1, 1, H), _l3),                       # ff2 b
        pl.BlockSpec((1, 1, H), _l3),                       # ln2 gamma
        pl.BlockSpec((1, 1, H), _l3),                       # ln2 beta
    ]
    out_specs = (
        pl.BlockSpec((1, BS, H), _l3),                      # hidden_states[l] (pre-layer input)
        pl.BlockSpec((BS, H), _c2),                         # final hidden state (resident accumulator)
    )
    # TODO(synk): with H=32 the out blocks use masked 32-lane stores; a lane-dense (.., 128) slab
    #             layout would remove them but needs an in-kernel relayout — negligible at this size.
    return pl.pallas_call(
        functools.partial(_encoder_kernel, B=B, S=S, num_heads=nh,
                          pos_k=POS_CONV_KERNEL, eps=LN_EPS),
        grid=(L,),
        out_shape=(jax.ShapeDtypeStruct((L, BS, H), jnp.float32),
                   jax.ShapeDtypeStruct((BS, H), jnp.float32)),
        in_specs=in_specs,
        out_specs=out_specs,
        scratch_shapes=[pltpu.VMEM((BS, H), jnp.float32)],
        compiler_params=_ARBITRARY,
    )(h_flat, hp, kp["pos_w"], kp["pos_b"], kp["enc_ln_g"], kp["enc_ln_b"],
      kp["qw"], kp["qb"], kp["kw"], kp["kb"], kp["vw"], kp["vb"],
      kp["ow"], kp["ob"], kp["ln1g"], kp["ln1b"],
      kp["f1w"], kp["f1b"], kp["f2w"], kp["f2b"], kp["ln2g"], kp["ln2b"])


# ======================= glue (im2col) =======================
def unfold1d(x, kernel, stride):
    """x: (B, L, C) -> patches (B, Lout, kernel*C), flattened in (k, c) order."""
    # TODO(synk): at production waveform lengths replace this HBM im2col with in-kernel time
    #             windowing + time-tiled grids (and streaming GroupNorm stats) to fit v7x VMEM.
    B, L, C = x.shape
    Lout = (L - kernel) // stride + 1
    idx = jnp.arange(Lout)[:, None] * stride + jnp.arange(kernel)[None, :]
    patches = x[:, idx, :]                          # (B, Lout, kernel, C)
    return patches.reshape(B, Lout, kernel * C)


# ======================= parameters (deterministic, synthetic) =======================
def init_params(key):
    keys = iter(jax.random.split(key, 128))

    def w(shape, scale=0.05):
        return jax.random.normal(next(keys), shape, jnp.float32) * scale

    in_pg = HIDDEN // POS_CONV_GROUPS
    p = {
        # conv feature extractor (conv_bias=False in hubert-base -> no conv biases)
        "conv0_w": w((CONV_KERNEL[0] * 1, CONV_DIM[0])),
        "gn_g": jnp.ones((CONV_DIM[0],), jnp.float32),
        "gn_b": jnp.zeros((CONV_DIM[0],), jnp.float32),
        "conv1_w": w((CONV_KERNEL[1] * CONV_DIM[0], CONV_DIM[1])),
        # feature projection
        "fp_ln_g": jnp.ones((CONV_DIM[1],), jnp.float32),
        "fp_ln_b": jnp.zeros((CONV_DIM[1],), jnp.float32),
        "fp_w": w((CONV_DIM[1], HIDDEN)),
        "fp_b": w((HIDDEN,)),
        # positional grouped conv (weight-norm collapsed; layout: group, tap, in_pg, out_pg)
        "pos_w": w((POS_CONV_GROUPS, POS_CONV_KERNEL, in_pg, in_pg)),
        "pos_b": w((HIDDEN,)),
        "enc_ln_g": jnp.ones((HIDDEN,), jnp.float32),
        "enc_ln_b": jnp.zeros((HIDDEN,), jnp.float32),
        "layers": [],
    }
    for _ in range(NUM_LAYERS):
        p["layers"].append({
            "q_w": w((HIDDEN, HIDDEN)), "q_b": w((HIDDEN,)),
            "k_w": w((HIDDEN, HIDDEN)), "k_b": w((HIDDEN,)),
            "v_w": w((HIDDEN, HIDDEN)), "v_b": w((HIDDEN,)),
            "o_w": w((HIDDEN, HIDDEN)), "o_b": w((HIDDEN,)),
            "attn_ln_g": jnp.ones((HIDDEN,), jnp.float32),
            "attn_ln_b": jnp.zeros((HIDDEN,), jnp.float32),
            "ff1_w": w((HIDDEN, INTERMEDIATE)), "ff1_b": w((INTERMEDIATE,)),
            "ff2_w": w((INTERMEDIATE, HIDDEN)), "ff2_b": w((HIDDEN,)),
            "final_ln_g": jnp.ones((HIDDEN,), jnp.float32),
            "final_ln_b": jnp.zeros((HIDDEN,), jnp.float32),
        })
    return p


def pack_params(p):
    """Host-side repack: stack layers, per-head attention layout, bf16 weight pre-cast,
       query scale folded into q weights/bias, block-diagonal positional conv weight."""
    nh, hd, H, L = NUM_HEADS, HEAD_DIM, HIDDEN, NUM_LAYERS
    scale = float(hd) ** -0.5
    lyrs = p["layers"]

    def head_in(w_):     # (H, nh*hd) -> (nh, H, hd)
        return jnp.transpose(w_.reshape(H, nh, hd), (1, 0, 2))

    def stack(fn):
        return jnp.stack([fn(l) for l in lyrs])

    ipg = H // POS_CONV_GROUPS
    pos_full = jnp.zeros((POS_CONV_KERNEL, H, H), jnp.float32)
    for g in range(POS_CONV_GROUPS):
        pos_full = pos_full.at[:, g * ipg:(g + 1) * ipg, g * ipg:(g + 1) * ipg].set(p["pos_w"][g])

    return {
        "conv0_w": p["conv0_w"].astype(MXU_DTYPE),
        "gn_g": p["gn_g"].reshape(1, -1), "gn_b": p["gn_b"].reshape(1, -1),
        "conv1_w": p["conv1_w"].astype(MXU_DTYPE),
        "fp_ln_g": p["fp_ln_g"].reshape(1, -1), "fp_ln_b": p["fp_ln_b"].reshape(1, -1),
        "fp_w": p["fp_w"].astype(MXU_DTYPE), "fp_b": p["fp_b"].reshape(1, -1),
        "pos_w": pos_full.astype(MXU_DTYPE), "pos_b": p["pos_b"].reshape(1, -1),
        "enc_ln_g": p["enc_ln_g"].reshape(1, -1), "enc_ln_b": p["enc_ln_b"].reshape(1, -1),
        "qw": stack(lambda l: head_in(l["q_w"]) * scale).astype(MXU_DTYPE),
        "qb": stack(lambda l: l["q_b"].reshape(nh, 1, hd) * scale),
        "kw": stack(lambda l: head_in(l["k_w"])).astype(MXU_DTYPE),
        "kb": stack(lambda l: l["k_b"].reshape(nh, 1, hd)),
        "vw": stack(lambda l: head_in(l["v_w"])).astype(MXU_DTYPE),
        "vb": stack(lambda l: l["v_b"].reshape(nh, 1, hd)),
        "ow": stack(lambda l: l["o_w"].reshape(nh, hd, H)).astype(MXU_DTYPE),
        "ob": stack(lambda l: l["o_b"].reshape(1, H)),
        "ln1g": stack(lambda l: l["attn_ln_g"].reshape(1, H)),
        "ln1b": stack(lambda l: l["attn_ln_b"].reshape(1, H)),
        "f1w": stack(lambda l: l["ff1_w"]).astype(MXU_DTYPE),
        "f1b": stack(lambda l: l["ff1_b"].reshape(1, -1)),
        "f2w": stack(lambda l: l["ff2_w"]).astype(MXU_DTYPE),
        "f2b": stack(lambda l: l["ff2_b"].reshape(1, -1)),
        "ln2g": stack(lambda l: l["final_ln_g"].reshape(1, H)),
        "ln2b": stack(lambda l: l["final_ln_b"].reshape(1, H)),
    }


# ======================= forward =======================
def hubert_encoder_forward(kp, audio, output_hidden_states=True, layer_indices=None):
    """audio: (B, T) float32 waveform. Mirrors HuBERTEncoder.forward (eval mode)."""
    B = audio.shape[0]

    # --- preprocess_audio: Wav2Vec2FeatureExtractor zero-mean / unit-variance per utterance ---
    mean = jnp.mean(audio, axis=-1, keepdims=True)
    var = jnp.var(audio, axis=-1, keepdims=True)
    x = (audio - mean) / jnp.sqrt(var + 1e-7)
    x = x[..., None]                                   # (B, T, 1) channels-last

    # --- conv feature extractor (conv0+GroupNorm+GELU fused; conv1+GELU+feat-proj fused) ---
    p0 = unfold1d(x, CONV_KERNEL[0], CONV_STRIDE[0])
    c0 = conv0_groupnorm_gelu(p0, kp["conv0_w"], kp["gn_g"], kp["gn_b"])     # (B, L0, C0)

    p1 = unfold1d(c0, CONV_KERNEL[1], CONV_STRIDE[1])                        # (B, S, K1*C0)
    _, S, KC = p1.shape
    h_flat = conv1_featproj(p1.reshape(B * S, KC), kp["conv1_w"],
                            kp["fp_ln_g"], kp["fp_ln_b"],
                            kp["fp_w"], kp["fp_b"])                          # (B*S, HIDDEN)

    # --- fused encoder: pos-conv + residual + LN + ALL transformer layers in ONE pallas_call ---
    pad = POS_CONV_KERNEL // 2
    hp = jnp.pad(h_flat.reshape(B, S, HIDDEN), ((0, 0), (pad, pad), (0, 0)))
    hs_stack, last = encoder_stack(h_flat, hp, kp, B=B, S=S)

    last3 = last.reshape(B, S, HIDDEN)
    result = {"last_hidden_state": last3, "pooler_output": None}   # HubertModel has no pooler
    if output_hidden_states:
        hs4 = hs_stack.reshape(NUM_LAYERS, B, S, HIDDEN)
        hidden_states = [hs4[i] for i in range(NUM_LAYERS)] + [last3]
        if layer_indices is not None:
            hidden_states = [hidden_states[i] for i in layer_indices if i < len(hidden_states)]
        result["hidden_states"] = hidden_states
    return result


# ======================= demo =======================
if __name__ == "__main__":
    key = jax.random.PRNGKey(0)
    pkey, akey = jax.random.split(key)
    params = pack_params(init_params(pkey))

    # small waveform: (B=2, T=330) -> conv stack gives seq = 32 frames
    audio = jax.random.normal(akey, (2, 330), jnp.float32)

    out = hubert_encoder_forward(params, audio, output_hidden_states=True)
    jax.block_until_ready(out["last_hidden_state"])
    for hs in out["hidden_states"]:
        jax.block_until_ready(hs)

    assert out["last_hidden_state"].shape == (2, 32, HIDDEN)
    assert out["pooler_output"] is None
    assert len(out["hidden_states"]) == NUM_LAYERS + 1
    assert all(hs.shape == (2, 32, HIDDEN) for hs in out["hidden_states"])
    assert bool(jnp.all(jnp.isfinite(out["last_hidden_state"])))
    print("KERNEL_OK")
</pallas_src>

<mosaic_0001>
module attributes {stable_mosaic.version = 11 : i64} {
  func.func @_conv0_gn_gelu_kernel(%arg0: i32, %arg1: memref<1x65x10xf32, #tpu.memory_space<vmem>>, %arg2: memref<10x32xbf16, #tpu.memory_space<vmem>>, %arg3: memref<1x32xf32, #tpu.memory_space<vmem>>, %arg4: memref<1x32xf32, #tpu.memory_space<vmem>>, %arg5: memref<1x65x32xf32, #tpu.memory_space<vmem>>) attributes {dimension_semantics = [#tpu.dimension_semantics<parallel>], iteration_bounds = array<i64: 2>, scalar_prefetch = 0 : i64, scratch_operands = 0 : i64, tpu.core_type = #tpu.core_type<tc>, window_params = [{transform_indices = @transform_0, window_bounds = array<i64: 1, 65, 10>}, {pipeline_mode = #tpu.pipeline_mode<synchronous>, transform_indices = @transform_1, window_bounds = array<i64: 10, 32>}, {pipeline_mode = #tpu.pipeline_mode<synchronous>, transform_indices = @transform_2, window_bounds = array<i64: 1, 32>}, {pipeline_mode = #tpu.pipeline_mode<synchronous>, transform_indices = @transform_3, window_bounds = array<i64: 1, 32>}, {transform_indices = @transform_4, window_bounds = array<i64: 1, 65, 32>}]} {
    %c0 = arith.constant 0 : index
    %c0_0 = arith.constant 0 : index
    %c0_1 = arith.constant 0 : index
    %0 = vector.load %arg1[%c0, %c0_0, %c0_1] : memref<1x65x10xf32, #tpu.memory_space<vmem>>, vector<1x65x10xf32>
    %1 = vector.shape_cast %0 : vector<1x65x10xf32> to vector<65x10xf32>
    %2 = arith.truncf %1 : vector<65x10xf32> to vector<65x10xbf16>
    %c0_2 = arith.constant 0 : index
    %c0_3 = arith.constant 0 : index
    %3 = vector.load %arg2[%c0_2, %c0_3] : memref<10x32xbf16, #tpu.memory_space<vmem>>, vector<10x32xbf16>
    %cst = arith.constant dense<0.000000e+00> : vector<65x32xf32>
    %4 = tpu.matmul %2, %3, %cst {dimension_numbers = #tpu.dot_dimension_numbers<[1], [0], [0], [1], [0, 0, 1, 1], [], []>} : vector<65x10xbf16>, vector<10x32xbf16>, vector<65x32xf32> -> vector<65x32xf32>
    %cst_4 = arith.constant dense<0.000000e+00> : vector<32xf32>
    %5 = vector.multi_reduction <add>, %4, %cst_4 [0] : vector<65x32xf32> to vector<32xf32>
    %6 = vector.shape_cast %5 : vector<32xf32> to vector<1x32xf32>
    %cst_5 = arith.constant 6.500000e+01 : f32
    %7 = vector.broadcast %cst_5 : f32 to vector<1x32xf32>
    %8 = arith.divf %6, %7 : vector<1x32xf32>
    %9 = vector.broadcast %8 : vector<1x32xf32> to vector<65x32xf32>
    %10 = arith.subf %4, %9 : vector<65x32xf32>
    %11 = arith.mulf %10, %10 : vector<65x32xf32>
    %cst_6 = arith.constant dense<0.000000e+00> : vector<32xf32>
    %12 = vector.multi_reduction <add>, %11, %cst_6 [0] : vector<65x32xf32> to vector<32xf32>
    %13 = vector.shape_cast %12 : vector<32xf32> to vector<1x32xf32>
    %cst_7 = arith.constant 6.500000e+01 : f32
    %14 = vector.broadcast %cst_7 : f32 to vector<1x32xf32>
    %15 = arith.divf %13, %14 : vector<1x32xf32>
    %16 = vector.broadcast %8 : vector<1x32xf32> to vector<65x32xf32>
    %17 = arith.subf %4, %16 : vector<65x32xf32>
    %cst_8 = arith.constant 9.99999974E-6 : f32
    %18 = vector.broadcast %cst_8 : f32 to vector<1x32xf32>
    %19 = arith.addf %15, %18 : vector<1x32xf32>
    %20 = math.rsqrt %19 : vector<1x32xf32>
    %21 = vector.broadcast %20 : vector<1x32xf32> to vector<65x32xf32>
    %22 = arith.mulf %17, %21 : vector<65x32xf32>
    %c0_9 = arith.constant 0 : index
    %c0_10 = arith.constant 0 : index
    %23 = vector.load %arg3[%c0_9, %c0_10] : memref<1x32xf32, #tpu.memory_space<vmem>>, vector<1x32xf32>
    %24 = vector.broadcast %23 : vector<1x32xf32> to vector<65x32xf32>
    %25 = arith.mulf %22, %24 : vector<65x32xf32>
    %c0_11 = arith.constant 0 : index
    %c0_12 = arith.constant 0 : index
    %26 = vector.load %arg4[%c0_11, %c0_12] : memref<1x32xf32, #tpu.memory_space<vmem>>, vector<1x32xf32>
    %27 = vector.broadcast %26 : vector<1x32xf32> to vector<65x32xf32>
    %28 = arith.addf %25, %27 : vector<65x32xf32>
    %29 = arith.mulf %28, %28 : vector<65x32xf32>
    %30 = arith.mulf %28, %29 : vector<65x32xf32>
    %cst_13 = arith.constant 4.471500e-02 : f32
    %31 = vector.broadcast %cst_13 : f32 to vector<65x32xf32>
    %32 = arith.mulf %31, %30 : vector<65x32xf32>
    %33 = arith.addf %28, %32 : vector<65x32xf32>
    %cst_14 = arith.constant 0.797884583 : f32
    %34 = vector.broadcast %cst_14 : f32 to vector<65x32xf32>
    %35 = arith.mulf %34, %33 : vector<65x32xf32>
    %36 = math.tanh %35 : vector<65x32xf32>
    %cst_15 = arith.constant 1.000000e+00 : f32
    %37 = vector.broadcast %cst_15 : f32 to vector<65x32xf32>
    %38 = arith.addf %37, %36 : vector<65x32xf32>
    %cst_16 = arith.constant 5.000000e-01 : f32
    %39 = vector.broadcast %cst_16 : f32 to vector<65x32xf32>
    %40 = arith.mulf %39, %38 : vector<65x32xf32>
    %41 = arith.mulf %28, %40 : vector<65x32xf32>
    %c0_17 = arith.constant 0 : index
    %c0_18 = arith.constant 0 : index
    %c0_19 = arith.constant 0 : index
    %42 = vector.load %arg5[%c0_17, %c0_18, %c0_19] : memref<1x65x32xf32, #tpu.memory_space<vmem>>, vector<1x65x32xf32>
    %43 = vector.shape_cast %42 : vector<1x65x32xf32> to vector<65x32xf32>
    %44 = vector.shape_cast %41 : vector<65x32xf32> to vector<1x65x32xf32>
    tpu.vector_store %arg5[%c0_17, %c0_18, %c0_19], %44 {strides = array<i32>} : memref<1x65x32xf32, #tpu.memory_space<vmem>>, vector<1x65x32xf32>,
    return
  }
  func.func @transform_0(%arg0: i32) -> (i32, i32, i32) {
    %c0_i32 = arith.constant 0 : i32
    %c0_i32_0 = arith.constant 0 : i32
    %c0_i32_1 = arith.constant 0 : i32
    return %arg0, %c0_i32, %c0_i32_0 : i32, i32, i32
  }
  func.func @transform_1(%arg0: i32) -> (i32, i32) {
    %c0_i32 = arith.constant 0 : i32
    %c0_i32_0 = arith.constant 0 : i32
    %c0_i32_1 = arith.constant 0 : i32
    return %c0_i32, %c0_i32_0 : i32, i32
  }
  func.func @transform_2(%arg0: i32) -> (i32, i32) {
    %c0_i32 = arith.constant 0 : i32
    %c0_i32_0 = arith.constant 0 : i32
    %c0_i32_1 = arith.constant 0 : i32
    return %c0_i32, %c0_i32_0 : i32, i32
  }
  func.func @transform_3(%arg0: i32) -> (i32, i32) {
    %c0_i32 = arith.constant 0 : i32
    %c0_i32_0 = arith.constant 0 : i32
    %c0_i32_1 = arith.constant 0 : i32
    return %c0_i32, %c0_i32_0 : i32, i32
  }
  func.func @transform_4(%arg0: i32) -> (i32, i32, i32) {
    %c0_i32 = arith.constant 0 : i32
    %c0_i32_0 = arith.constant 0 : i32
    %c0_i32_1 = arith.constant 0 : i32
    return %arg0, %c0_i32, %c0_i32_0 : i32, i32, i32
  }
}

</mosaic_0001>

<llo_original>
// kernel: tpu_custom_call.1
$region0: #{tpu_custom_call.1}
  #allocation0 [shape = 'u32[]', space=smem, size = 0x4, offset = 0x4, fixed_abs, tag = 'smem constant byte address 0x4 - core index']
  #allocation1 [shape = 'u32[72,128]{1,0:T(1,128)}', space=vmem, size = 0x9000, scoped, tag = 'internal scratch']
  %s0 = inlined_call_operand.vmem [shape: f32[2,65,10], index: 0, kind: input, shape index: {}]
  %s1 = inlined_call_operand.vmem [shape: bf16[10,32], index: 1, kind: input, shape index: {}]
  %s2 = inlined_call_operand.vmem [shape: f32[1,32], index: 2, kind: input, shape index: {}]
  %s3 = inlined_call_operand.vmem [shape: f32[1,32], index: 3, kind: input, shape index: {}]
  %s4 = inlined_call_operand.vmem [shape: f32[2,65,32], index: 4, kind: output, shape index: {}]
  %s5 = sld [smem:[#allocation0]]
  $region49: #{tpu_custom_call.1} parent=0
    _
  %s7 = ssub.s32 1, %s5
  %s8 = scalar_select 0, %s7, %s5
  loop: start=0, step=1, limit=4
  $region2: #{tpu_custom_call.1} parent=0 // loop_pre_header
    _
  $region3: #{tpu_custom_call.1} parent=0 // loop_header
    %s10 = sphi 0, %s14
    %p11 = scmp.ge.s32.totalorder %s10, 4
    %s20 = sphi 0, %s22
    %s23 = sphi 0, %s20
    %s24 = sphi 0, %s23
    %s40 = sphi 0, %s24
    %s44 = sphi 0, %s44
    %s46 = sphi 0, %s44
    %s47 = sphi 0, %s46
    %s61 = sphi 0, %s47
    %s65 = sphi 0, %s65
    %s67 = sphi 0, %s65
    %s68 = sphi 0, %s67
    %s82 = sphi 0, %s68
    %s86 = sphi 0, %s86
    %s88 = sphi 0, %s86
    %s89 = sphi 0, %s88
    %s103 = sphi 0, %s89
    %s109 = sphi 0, %s111
    %s112 = sphi 0, %s109
    %s113 = sphi 0, %s112
    %s129 = sphi 0, %s113
  $region4: #{tpu_custom_call.1} parent=0 // loop_header_branch
    %13 = sbr.rel (%p11) target = $region8
  $region5: #{tpu_custom_call.1} parent=0 // loop_body
    %s15 = ssub.s32 %s10, 1
    %s16 = ssub.s32 %s10, 2
    %s17 = sadd.s32 %s10, 1
    %s18 = ssub.s32 %s10, %s17
    %p19 = scmp.eq.s32.totalorder %s18, 0
    %s21 = sadd.s32 %s20, 1
    %s22 = scalar_select %p19, %s20, %s21
    %p25 = pneg %p19
    %p26 = scmp.eq.s32.totalorder %s10, 1
    %p27 = por %p25, %p26
    %p28 = scmp.ne.s32.totalorder %s20, %s23
    %p29 = scmp.eq.s32.totalorder %s10, 0
    %p30 = por %p28, %p29
    %p31 = scmp.ne.s32.totalorder %s20, %s23
    %p32 = scmp.eq.s32.totalorder %s15, 1
    %p33 = por %p31, %p32
    %p34 = scmp.ne.s32.totalorder %s23, %s24
    %p35 = scmp.eq.s32.totalorder %s15, 0
    %p36 = por %p34, %p35
    %p37 = scmp.ne.s32.totalorder %s23, %s24
    %p38 = scmp.eq.s32.totalorder %s16, 1
    %p39 = por %p37, %p38
    %p41 = scmp.ne.s32.totalorder %s24, %s40
    %p42 = scmp.eq.s32.totalorder %s16, 0
    %p43 = por %p41, %p42
    %s45 = sadd.s32 %s44, 1
    %p48 = scmp.eq.s32.totalorder %s10, 1
    %p49 = scmp.ne.s32.totalorder %s44, %s46
    %p50 = scmp.eq.s32.totalorder %s10, 0
    %p51 = por %p49, %p50
    %p52 = scmp.ne.s32.totalorder %s44, %s46
    %p53 = scmp.eq.s32.totalorder %s15, 1
    %p54 = por %p52, %p53
    %p55 = scmp.ne.s32.totalorder %s46, %s47
    %p56 = scmp.eq.s32.totalorder %s15, 0
    %p57 = por %p55, %p56
    %p58 = scmp.ne.s32.totalorder %s46, %s47
    %p59 = scmp.eq.s32.totalorder %s16, 1
    %p60 = por %p58, %p59
    %p62 = scmp.ne.s32.totalorder %s47, %s61
    %p63 = scmp.eq.s32.totalorder %s16, 0
    %p64 = por %p62, %p63
    %s66 = sadd.s32 %s65, 1
    %p69 = scmp.eq.s32.totalorder %s10, 1
    %p70 = scmp.ne.s32.totalorder %s65, %s67
    %p71 = scmp.eq.s32.totalorder %s10, 0
    %p72 = por %p70, %p71
    %p73 = scmp.ne.s32.totalorder %s65, %s67
    %p74 = scmp.eq.s32.totalorder %s15, 1
    %p75 = por %p73, %p74
    %p76 = scmp.ne.s32.totalorder %s67, %s68
    %p77 = scmp.eq.s32.totalorder %s15, 0
    %p78 = por %p76, %p77
    %p79 = scmp.ne.s32.totalorder %s67, %s68
    %p80 = scmp.eq.s32.totalorder %s16, 1
    %p81 = por %p79, %p80
    %p83 = scmp.ne.s32.totalorder %s68, %s82
    %p84 = scmp.eq.s32.totalorder %s16, 0
    %p85 = por %p83, %p84
    %s87 = sadd.s32 %s86, 1
    %p90 = scmp.eq.s32.totalorder %s10, 1
    %p91 = scmp.ne.s32.totalorder %s86, %s88
    %p92 = scmp.eq.s32.totalorder %s10, 0
    %p93 = por %p91, %p92
    %p94 = scmp.ne.s32.totalorder %s86, %s88
    %p95 = scmp.eq.s32.totalorder %s15, 1
    %p96 = por %p94, %p95
    %p97 = scmp.ne.s32.totalorder %s88, %s89
    %p98 = scmp.eq.s32.totalorder %s15, 0
    %p99 = por %p97, %p98
    %p100 = scmp.ne.s32.totalorder %s88, %s89
    %p101 = scmp.eq.s32.totalorder %s16, 1
    %p102 = por %p100, %p101
    %p104 = scmp.ne.s32.totalorder %s89, %s103
    %p105 = scmp.eq.s32.totalorder %s16, 0
    %p106 = por %p104, %p105
    %s107 = ssub.s32 %s10, %s17
    %p108 = scmp.eq.s32.totalorder %s107, 0
    %s110 = sadd.s32 %s109, 1
    %s111 = scalar_select %p108, %s109, %s110
    %p114 = pneg %p108
    %p115 = scmp.eq.s32.totalorder %s10, 1
    %p116 = por %p114, %p115
    %p117 = scmp.ne.s32.totalorder %s109, %s112
    %p118 = scmp.eq.s32.totalorder %s10, 0
    %p119 = por %p117, %p118
    %p120 = scmp.ne.s32.totalorder %s109, %s112
    %p121 = scmp.eq.s32.totalorder %s15, 1
    %p122 = por %p120, %p121
    %p123 = scmp.ne.s32.totalorder %s112, %s113
    %p124 = scmp.eq.s32.totalorder %s15, 0
    %p125 = por %p123, %p124
    %p126 = scmp.ne.s32.totalorder %s112, %s113
    %p127 = scmp.eq.s32.totalorder %s16, 1
    %p128 = por %p126, %p127
    %p130 = scmp.ne.s32.totalorder %s113, %s129
    %p131 = scmp.eq.s32.totalorder %s16, 0
    %p132 = por %p130, %p131
    %p133 = scmp.le.s32.totalorder 1, %s10
    %p134 = scmp.lt.s32.totalorder %s10, 3
    %p135 = pnand %p133, %p134
    %p136 = pneg %p135
    // Predicated region
    $region9: #{tpu_custom_call.1} parent=5 // pred_check
      _
    $region10: #{tpu_custom_call.1} parent=5 // pred_check_branch
      %138 = sbr.rel (%p135) target = $region12
    $region11: #{tpu_custom_call.1} parent=5 // pred_region
      %s139 = ssub.s32 %s10, 1
      // Predicated region
      $region13: #{tpu_custom_call.1} parent=11 // pred_check
        %p140 = pneg %p57
      $region14: #{tpu_custom_call.1} parent=11 // pred_check_branch
        %142 = sbr.rel (%p140) target = $region16
      $region15: #{tpu_custom_call.1} parent=11 // pred_region
        _
      $region16: #{tpu_custom_call.1} parent=11 // pred_fallthru
        _
      // Predicated region
      $region17: #{tpu_custom_call.1} parent=11 // pred_check
        %p143 = pneg %p78
      $region18: #{tpu_custom_call.1} parent=11 // pred_check_branch
        %145 = sbr.rel (%p143) target = $region20
      $region19: #{tpu_custom_call.1} parent=11 // pred_region
        _
      $region20: #{tpu_custom_call.1} parent=11 // pred_fallthru
        _
      // Predicated region
      $region21: #{tpu_custom_call.1} parent=11 // pred_check
        %p146 = pneg %p99
      $region22: #{tpu_custom_call.1} parent=11 // pred_check_branch
        %148 = sbr.rel (%p146) target = $region24
      $region23: #{tpu_custom_call.1} parent=11 // pred_region
        _
      $region24: #{tpu_custom_call.1} parent=11 // pred_fallthru
        _
    $region12: #{tpu_custom_call.1} parent=5 // pred_fallthru
      _
    %p149 = scmp.lt.s32.totalorder %s10, 2
    // Predicated region
    $region25: #{tpu_custom_call.1} parent=5 // pred_check
      %p150 = pneg %p149
    $region26: #{tpu_custom_call.1} parent=5 // pred_check_branch
      %152 = sbr.rel (%p150) target = $region28
    $region27: #{tpu_custom_call.1} parent=5 // pred_region
      // Predicated region
      $region29: #{tpu_custom_call.1} parent=27 // pred_check
        %p153 = pneg %p30
      $region30: #{tpu_custom_call.1} parent=27 // pred_check_branch
        %155 = sbr.rel (%p153) target = $region32
      $region31: #{tpu_custom_call.1} parent=27 // pred_region
        %p156 = scmp.lt.s32.totalorder %s10, 1
        %s157 = scalar_select %p156, %s10, 1
        %s158 = smul.addr %s157, 9
        %s159 = smul.addr %s158, 8
        %s160 = scalar_lea.vmem %s0, %s159
      $region32: #{tpu_custom_call.1} parent=27 // pred_fallthru
        _
    $region28: #{tpu_custom_call.1} parent=5 // pred_fallthru
      _
    %p161 = scmp.le.s32.totalorder 1, %s10
    %p162 = scmp.lt.s32.totalorder %s10, 3
    %p163 = pnand %p161, %p162
    %p164 = pneg %p163
    // Predicated region
    $region33: #{tpu_custom_call.1} parent=5 // pred_check
      _
    $region34: #{tpu_custom_call.1} parent=5 // pred_check_branch
      %166 = sbr.rel (%p163) target = $region36
    $region35: #{tpu_custom_call.1} parent=5 // pred_region
      %s167 = ssub.s32 %s10, 1
      %p168 = scmp.lt.s32.totalorder %s15, 1
      %s169 = scalar_select %p168, %s15, 1
      %s170 = smul.addr %s169, 9
      %s171 = smul.addr %s170, 8
      %s172 = scalar_lea.vmem %s0, %s171
      %p173 = pneg %p36
      %p174 = pneg %p33
      %p175 = pneg %p57
      %p176 = pneg %p54
      %p177 = pneg %p78
      %p178 = pneg %p75
      %p179 = pneg %p99
      %p180 = pneg %p96
      %p181 = pneg %p125
      %p182 = pneg %p122
      %p183 = scmp.lt.s32.totalorder %s15, 1
      %s184 = scalar_select %p183, %s15, 1
      %s185 = smul.addr %s184, 9
      %s186 = smul.addr %s185, 8
      %s187 = scalar_lea.vmem %s4, %s186
      %p188 = scmp.lt.s32.totalorder %s15, 1
      %s189 = scalar_select %p188, %s15, 1
      %s190 = smul.addr %s189, 9
      %s191 = smul.addr %s190, 8
      %s192 = scalar_lea.vmem %s0, %s191
      %p193 = scmp.lt.s32.totalorder %s15, 1
      %s194 = scalar_select %p193, %s15, 1
      %s195 = smul.addr %s194, 9
      %s196 = smul.addr %s195, 8
      %s197 = scalar_lea.vmem %s4, %s196
      %v199 = vld [vmem:[%s192] sm:$0xff]
      %v200 = vld [vmem:[%s192 + $0x8] sm:$0xff]
      %v201 = vld [vmem:[%s192 + $0x10] sm:$0xff]
      %v202 = vld [vmem:[%s192 + $0x18] sm:$0xff]
      %v203 = vld [vmem:[%s192 + $0x20] sm:$0xff]
      %v204 = vld [vmem:[%s192 + $0x28] sm:$0xff]
      %v205 = vld [vmem:[%s192 + $0x30] sm:$0xff]
      %v206 = vld [vmem:[%s192 + $0x38] sm:$0xff]
      %v207 = vld [vmem:[%s192 + $0x40] sm:$0x1]
      %v208 = vpack.c.bf16 %v200, %v199
      %v209 = vpack.c.bf16 %v202, %v201
      %v210 = vpack.c.bf16 %v204, %v203
      %v211 = vpack.c.bf16 %v206, %v205
      %v212 = vpack.c.bf16 %v207, %v207
      %v213 = vld [vmem:[%s1] sm:$0xf]
      %v214 = vld [vmem:[%s1 + $0x4] sm:$0x1]
      %v217 = vunpack.c.l.b16 %v213
      %v218 = vunpack.c.l.b16 %v214
      %v219 = vpack.c.b16 %v218, %v217
      %vm220 = vcmask 80896
      %v222 = vsel %vm220, %v208, 0
      %v225 = vsel %vm220, %v209, 0
      %v228 = vsel %vm220, %v210, 0
      %v231 = vsel %vm220, %v211, 0
      %v234 = vsel %vm220, %v212, 0
      %vm236 = vcmask 1044480
      %v238 = vsel %vm236, %v219, 0
      %240 = vmatpush.bf16.msra.mxu0 0
      %241 = vmatpush.bf16.msra.mxu0 0
      %242 = vmatpush.bf16.msra.mxu0 0
      %243 = vmatpush.bf16.msra.mxu0 0
      %244 = vmatpush.bf16.msra.mxu0 0
      %245 = vmatpush.bf16.msra.mxu0 0
      %246 = vmatpush.bf16.msra.mxu0 0
      %247 = vmatpush.bf16.msra.mxu0 %v238
      %248 = vmatmul.bf16.gmra.mxu0 %v222
      %v249 = vpop.f32.mrf.mxu0
      %v250 = vadd.f32 0.0, %v249
      %v251 = vpop.f32.mrf.mxu0
      %v252 = vadd.f32 0.0, %v251
      %253 = vmatmul.bf16.gmra.mxu0 %v225
      %v254 = vpop.f32.mrf.mxu0
      %v255 = vadd.f32 0.0, %v254
      %v256 = vpop.f32.mrf.mxu0
      %v257 = vadd.f32 0.0, %v256
      %258 = vmatmul.bf16.gmra.mxu0 %v228
      %v259 = vpop.f32.mrf.mxu0
      %v260 = vadd.f32 0.0, %v259
      %v261 = vpop.f32.mrf.mxu0
      %v262 = vadd.f32 0.0, %v261
      %263 = vmatmul.bf16.gmra.mxu0 %v231
      %v264 = vpop.f32.mrf.mxu0
      %v265 = vadd.f32 0.0, %v264
      %v266 = vpop.f32.mrf.mxu0
      %v267 = vadd.f32 0.0, %v266
      %268 = vmatmul.bf16.gmra.mxu0 %v234
      %v269 = vpop.f32.mrf.mxu0
      %v270 = vadd.f32 0.0, %v269
      %v271 = vpop.f32.mrf.mxu0
      %272 = vdwg.mxu0
      %vm273 = vcmask 261120
      %v274 = vsel %vm273, %v250, 0.0
      %v275 = vsel %vm273, %v252, 0.0
      %v276 = vadd.f32 %v274, %v275
      %v277 = vsel %vm273, %v255, 0.0
      %v278 = vadd.f32 %v276, %v277
      %v279 = vsel %vm273, %v257, 0.0
      %v280 = vadd.f32 %v278, %v279
      %v281 = vsel %vm273, %v260, 0.0
      %v282 = vadd.f32 %v280, %v281
      %v283 = vsel %vm273, %v262, 0.0
      %v284 = vadd.f32 %v282, %v283
      %v285 = vsel %vm273, %v265, 0.0
      %v286 = vadd.f32 %v284, %v285
      %v287 = vsel %vm273, %v267, 0.0
      %v288 = vadd.f32 %v286, %v287
      %vm289 = vcmask 253952
      %v290 = vsel %vm289, %v270, 0.0
      %v291 = vadd.f32 %v288, %v290
      %v292 = vrot.slane %v291, 4
      %v293 = vadd.f32 %v291, %v292
      %v294 = vrot.slane %v293, 2
      %v295 = vadd.f32 %v293, %v294
      %v296 = vrot.slane %v295, 1
      %v297 = vadd.f32 %v295, %v296
      %v298 = vrcp.pop 65.0
      %v299 = vmul.f32 65.0, %v298
      %v300 = vsub.f32 1.0, %v299
      %v301 = vmul.f32 %v298, %v300
      %v302 = vadd.f32 %v298, %v301
      %vm303 = vweird.f32 %v298
      %v304 = vsel %vm303, %v298, %v302
      %v305 = vmul.f32 %v297, %v304
      %v306 = vsub.f32 %v250, %v305
      %v307 = vsub.f32 %v252, %v305
      %v308 = vsub.f32 %v255, %v305
      %v309 = vsub.f32 %v257, %v305
      %v310 = vsub.f32 %v260, %v305
      %v311 = vsub.f32 %v262, %v305
      %v312 = vsub.f32 %v265, %v305
      %v313 = vsub.f32 %v267, %v305
      %v314 = vsub.f32 %v270, %v305
      %v315 = vmul.f32 %v306, %v306
      %v316 = vmul.f32 %v307, %v307
      %v317 = vmul.f32 %v308, %v308
      %v318 = vmul.f32 %v309, %v309
      %v319 = vmul.f32 %v310, %v310
      %v320 = vmul.f32 %v311, %v311
      %v321 = vmul.f32 %v312, %v312
      %v322 = vmul.f32 %v313, %v313
      %v323 = vmul.f32 %v314, %v314
      %v324 = vsel %vm273, %v315, 0.0
      %v325 = vsel %vm273, %v316, 0.0
      %v326 = vadd.f32 %v324, %v325
      %v327 = vsel %vm273, %v317, 0.0
      %v328 = vadd.f32 %v326, %v327
      %v329 = vsel %vm273, %v318, 0.0
      %v330 = vadd.f32 %v328, %v329
      %v331 = vsel %vm273, %v319, 0.0
      %v332 = vadd.f32 %v330, %v331
      %v333 = vsel %vm273, %v320, 0.0
      %v334 = vadd.f32 %v332, %v333
      %v335 = vsel %vm273, %v321, 0.0
      %v336 = vadd.f32 %v334, %v335
      %v337 = vsel %vm273, %v322, 0.0
      %v338 = vadd.f32 %v336, %v337
      %v339 = vsel %vm289, %v323, 0.0
      %v340 = vadd.f32 %v338, %v339
      %v341 = vrot.slane %v340, 4
      %v342 = vadd.f32 %v340, %v341
      %v343 = vrot.slane %v342, 2
      %v344 = vadd.f32 %v342, %v343
      %v345 = vrot.slane %v344, 1
      %v346 = vadd.f32 %v344, %v345
      %v347 = vmul.f32 %v346, %v304
      %v348 = vadd.f32 %v347, 1e-05
      %v349 = vrsqrt.pop %v348
      %v350 = vmul.f32 %v349, %v348
      %v351 = vmul.f32 %v350, %v349
      %v352 = vmul.f32 0.5, %v351
      %v353 = vsub.f32 1.5, %v352
      %v354 = vmul.f32 %v349, %v353
      %vm355 = vweird.f32 %v348
      %vm356 = vweird.f32 %v349
      %vm357 = vmor %vm355, %vm356
      %v358 = vsel %vm357, %v349, %v354
      %v359 = vmul.f32 %v306, %v358
      %v360 = vmul.f32 %v307, %v358
      %v361 = vmul.f32 %v308, %v358
      %v362 = vmul.f32 %v309, %v358
      %v363 = vmul.f32 %v310, %v358
      %v364 = vmul.f32 %v311, %v358
      %v365 = vmul.f32 %v312, %v358
      %v366 = vmul.f32 %v313, %v358
      %v367 = vmul.f32 %v314, %v358
      %v368 = vld [vmem:[%s2] sm:$0x1]
      %v370 = vperm.slane %v368, 0
      %v372 = vmul.f32 %v359, %v370
      %v373 = vmul.f32 %v360, %v370
      %v374 = vmul.f32 %v361, %v370
      %v375 = vmul.f32 %v362, %v370
      %v376 = vmul.f32 %v363, %v370
      %v377 = vmul.f32 %v364, %v370
      %v378 = vmul.f32 %v365, %v370
      %v379 = vmul.f32 %v366, %v370
      %v380 = vmul.f32 %v367, %v370
      %v381 = vld [vmem:[%s3] sm:$0x1]
      %v383 = vperm.slane %v381, 0
      %v385 = vadd.f32 %v372, %v383
      %v386 = vadd.f32 %v373, %v383
      %v387 = vadd.f32 %v374, %v383
      %v388 = vadd.f32 %v375, %v383
      %v389 = vadd.f32 %v376, %v383
      %v390 = vadd.f32 %v377, %v383
      %v391 = vadd.f32 %v378, %v383
      %v392 = vadd.f32 %v379, %v383
      %v393 = vadd.f32 %v380, %v383
      %v394 = vmul.f32 %v385, %v385
      %v395 = vmul.f32 %v386, %v386
      %v396 = vmul.f32 %v387, %v387
      %v397 = vmul.f32 %v388, %v388
      %v398 = vmul.f32 %v389, %v389
      %v399 = vmul.f32 %v390, %v390
      %v400 = vmul.f32 %v391, %v391
      %v401 = vmul.f32 %v392, %v392
      %v402 = vmul.f32 %v393, %v393
      %v403 = vmul.f32 %v385, %v394
      %v404 = vmul.f32 %v386, %v395
      %v405 = vmul.f32 %v387, %v396
      %v406 = vmul.f32 %v388, %v397
      %v407 = vmul.f32 %v389, %v398
      %v408 = vmul.f32 %v390, %v399
      %v409 = vmul.f32 %v391, %v400
      %v410 = vmul.f32 %v392, %v401
      %v411 = vmul.f32 %v393, %v402
      %v412 = vmul.f32 %v403, 0.044715
      %v413 = vmul.f32 %v404, 0.044715
      %v414 = vmul.f32 %v405, 0.044715
      %v415 = vmul.f32 %v406, 0.044715
      %v416 = vmul.f32 %v407, 0.044715
      %v417 = vmul.f32 %v408, 0.044715
      %v418 = vmul.f32 %v409, 0.044715
      %v419 = vmul.f32 %v410, 0.044715
      %v420 = vmul.f32 %v411, 0.044715
      %v421 = vadd.f32 %v385, %v412
      %v422 = vadd.f32 %v386, %v413
      %v423 = vadd.f32 %v387, %v414
      %v424 = vadd.f32 %v388, %v415
      %v425 = vadd.f32 %v389, %v416
      %v426 = vadd.f32 %v390, %v417
      %v427 = vadd.f32 %v391, %v418
      %v428 = vadd.f32 %v392, %v419
      %v429 = vadd.f32 %v393, %v420
      %v430 = vmul.f32 %v421, 0.7978846
      %v431 = vmul.f32 %v422, 0.7978846
      %v432 = vmul.f32 %v423, 0.7978846
      %v433 = vmul.f32 %v424, 0.7978846
      %v434 = vmul.f32 %v425, 0.7978846
      %v435 = vmul.f32 %v426, 0.7978846
      %v436 = vmul.f32 %v427, 0.7978846
      %v437 = vmul.f32 %v428, 0.7978846
      %v438 = vmul.f32 %v429, 0.7978846
      %v439 = vtanh.pop %v430
      %v440 = vtanh.pop %v431
      %v441 = vtanh.pop %v432
      %v442 = vtanh.pop %v433
      %v443 = vtanh.pop %v434
      %v444 = vtanh.pop %v435
      %v445 = vtanh.pop %v436
      %v446 = vtanh.pop %v437
      %v447 = vtanh.pop %v438
      %v448 = vadd.f32 %v439, 1.0
      %v449 = vadd.f32 %v440, 1.0
      %v450 = vadd.f32 %v441, 1.0
      %v451 = vadd.f32 %v442, 1.0
      %v452 = vadd.f32 %v443, 1.0
      %v453 = vadd.f32 %v444, 1.0
      %v454 = vadd.f32 %v445, 1.0
      %v455 = vadd.f32 %v446, 1.0
      %v456 = vadd.f32 %v447, 1.0
      %v457 = vmul.f32 %v448, 0.5
      %v458 = vmul.f32 %v449, 0.5
      %v459 = vmul.f32 %v450, 0.5
      %v460 = vmul.f32 %v451, 0.5
      %v461 = vmul.f32 %v452, 0.5
      %v462 = vmul.f32 %v453, 0.5
      %v463 = vmul.f32 %v454, 0.5
      %v464 = vmul.f32 %v455, 0.5
      %v465 = vmul.f32 %v456, 0.5
      %v466 = vmul.f32 %v385, %v457
      %v467 = vmul.f32 %v386, %v458
      %v468 = vmul.f32 %v387, %v459
      %v469 = vmul.f32 %v388, %v460
      %v470 = vmul.f32 %v389, %v461
      %v471 = vmul.f32 %v390, %v462
      %v472 = vmul.f32 %v391, %v463
      %v473 = vmul.f32 %v392, %v464
      %v474 = vmul.f32 %v393, %v465
      %475 = vst.msk [vmem:[%s197] sm:$0xff] %vm273, %v466
      %476 = vst.msk [vmem:[%s197 + $0x8] sm:$0xff] %vm273, %v467
      %477 = vst.msk [vmem:[%s197 + $0x10] sm:$0xff] %vm273, %v468
      %478 = vst.msk [vmem:[%s197 + $0x18] sm:$0xff] %vm273, %v469
      %479 = vst.msk [vmem:[%s197 + $0x20] sm:$0xff] %vm273, %v470
      %480 = vst.msk [vmem:[%s197 + $0x28] sm:$0xff] %vm273, %v471
      %481 = vst.msk [vmem:[%s197 + $0x30] sm:$0xff] %vm273, %v472
      %482 = vst.msk [vmem:[%s197 + $0x38] sm:$0xff] %vm273, %v473
      %483 = vst.msk [vmem:[%s197 + $0x40] sm:$0x1] %vm289, %v474
      %p484 = scmp.lt.s32.totalorder %s15, 1
      %s485 = scalar_select %p484, %s15, 1
      %s486 = smul.addr %s485, 9
      %s487 = smul.addr %s486, 8
      %s488 = scalar_lea.vmem %s4, %s487
      // Predicated region
      $region37: #{tpu_custom_call.1} parent=35 // pred_check
        %p489 = pneg %p122
      $region38: #{tpu_custom_call.1} parent=35 // pred_check_branch
        %491 = sbr.rel (%p489) target = $region40
      $region39: #{tpu_custom_call.1} parent=35 // pred_region
        _
      $region40: #{tpu_custom_call.1} parent=35 // pred_fallthru
        _
    $region36: #{tpu_custom_call.1} parent=5 // pred_fallthru
      _
    %p492 = scmp.le.s32.totalorder 2, %s10
    // Predicated region
    $region41: #{tpu_custom_call.1} parent=5 // pred_check
      %p493 = pneg %p492
    $region42: #{tpu_custom_call.1} parent=5 // pred_check_branch
      %495 = sbr.rel (%p493) target = $region44
    $region43: #{tpu_custom_call.1} parent=5 // pred_region
      %s496 = ssub.s32 %s10, 2
      // Predicated region
      $region45: #{tpu_custom_call.1} parent=43 // pred_check
        %p497 = pneg %p128
      $region46: #{tpu_custom_call.1} parent=43 // pred_check_branch
        %499 = sbr.rel (%p497) target = $region48
      $region47: #{tpu_custom_call.1} parent=43 // pred_region
        %p500 = scmp.lt.s32.totalorder %s16, 1
        %s501 = scalar_select %p500, %s16, 1
        %s502 = smul.addr %s501, 9
        %s503 = smul.addr %s502, 8
        %s504 = scalar_lea.vmem %s4, %s503
      $region48: #{tpu_custom_call.1} parent=43 // pred_fallthru
        _
    $region44: #{tpu_custom_call.1} parent=5 // pred_fallthru
      _
  $region6: #{tpu_custom_call.1} parent=0 // loop_footer
    %s14 = sadd.s32 1, %s10
  $region7: #{tpu_custom_call.1} parent=0 // loop_footer_branch
    %9 = sbr.rel target = $region3
  $region8: #{tpu_custom_call.1} parent=0 // loop_exit
    _

</llo_original>
